<compile_context>
chip_gen: v5e
topology: v5e:2x2
jax: 0.10.0
libtpu: 0.0.40
codegen_flags: <defaults>
</compile_context>

<pallas_src>
import functools

import jax
import jax.numpy as jnp
from jax import lax
from jax.experimental import pallas as pl
from jax.experimental.pallas import tpu as pltpu


def _round_up(n, m):
    return ((n + m - 1) // m) * m


def _ceil_div(a, b):
    return -(-a // b)


def _leaky_relu(x, slope=0.1):
    # max(x, slope*x) == LeakyReLU(slope) for 0 <= slope <= 1; mul+max instead of cmp+mul+select.
    return jnp.maximum(x, slope * x)


def _default_act_dtype():
    """bf16 activations on bf16-VALU chips (v6e / v7x); f32 elsewhere (v5e and older)."""
    try:
        kind = jax.devices()[0].device_kind.lower()
    except Exception:
        return jnp.float32
    if ("v2" in kind) or ("v3" in kind) or ("v4" in kind) or ("v5" in kind):
        return jnp.float32
    return jnp.bfloat16


def mlp_kernel(x_ref, w1_ref, b1_ref, w2_ref, b2_ref, w3r_ref, b3_ref, o_ref, *, act_dtype):
    # Layer 1: bf16 MXU matmul with f32 accumulation.  x is DMA'd as f32 and cast here
    # on the VPU (the cast hides under the matmul).
    x = x_ref[...].astype(jnp.bfloat16)
    h1 = jnp.dot(x, w1_ref[...], preferred_element_type=jnp.float32)
    # Bias + LeakyReLU in act_dtype (bf16 on v6e/v7x -> packed VALU, f32 on v5e).
    h1 = _leaky_relu(h1.astype(act_dtype) + b1_ref[...])

    # Layer 2: bf16 MXU matmul with f32 accumulation.
    h2 = jnp.dot(h1.astype(jnp.bfloat16), w2_ref[...], preferred_element_type=jnp.float32)
    h2 = _leaky_relu(h2.astype(act_dtype) + b2_ref[...])

    # Layer 3 (128 -> 1), lane-dense: w3_row (1, H2) contracted against h2 (TM, H2) along
    # the feature axis (q @ k^T style transposed-RHS matmul) -> (1, TM).
    h3 = lax.dot_general(
        w3r_ref[...], h2.astype(jnp.bfloat16),
        dimension_numbers=(((1,), (1,)), ((), ())),
        preferred_element_type=jnp.float32)
    h3 = h3 + b3_ref[0]                                  # scalar bias from SMEM

    # Sigmoid(x) = 0.5 * tanh(0.5 x) + 0.5 : single EUP op per vreg on a lane-dense row.
    sig = 0.5 * jnp.tanh(0.5 * h3) + 0.5                  # (1, TM) f32
    o_ref[0] = sig.astype(o_ref.dtype)                    # o_ref block is (1, 1, TM)


def _pick_tile(B, block_rows):
    """Pick (tile_rows, padded_batch): multiples of 16, and an even number of tiles
    (>= 2) once the batch is non-trivial so v7x megacore gets balanced work."""
    B = max(int(B), 1)
    if B <= 256:                       # tiny batch: single tile
        TM = _round_up(B, 16)
        return TM, TM
    TM = _round_up(min(block_rows, _round_up(_ceil_div(B, 2), 16)), 16)
    n = _ceil_div(B, TM)
    if n % 2 == 1 and n > 1:           # make the grid even for the two TensorCores
        n += 1
        TM = _round_up(_ceil_div(B, n), 16)
        n = _ceil_div(B, TM)
    return TM, n * TM


def sensitive_discriminator(x, params, *, block_rows=4096, act_dtype=None):
    """x: (B, D_in) float32. params: dict of (in,out) weights and (1,out) biases.

    Returns sigmoid(MLP(x)) with shape (B, 1) float32.
    """
    B, D = x.shape
    if act_dtype is None:
        act_dtype = _default_act_dtype()

    TM, Bp = _pick_tile(B, block_rows)
    num_tiles = Bp // TM

    # x stays f32; pad the batch to a multiple of the tile.
    xp = x if Bp == B else jnp.pad(x, ((0, Bp - B), (0, 0)))

    w1 = params["w1"].astype(jnp.bfloat16)                     # (D, H1)
    w2 = params["w2"].astype(jnp.bfloat16)                     # (H1, H2)
    b1 = params["b1"].reshape(1, -1).astype(act_dtype)         # (1, H1)
    b2 = params["b2"].reshape(1, -1).astype(act_dtype)         # (1, H2)
    w3r = params["w3"].reshape(1, -1).astype(jnp.bfloat16)     # (1, H2) transposed last layer
    b3 = params["b3"].reshape(-1).astype(jnp.float32)          # (1,) scalar -> SMEM

    H1 = w1.shape[1]
    H2 = w2.shape[1]

    kernel = functools.partial(mlp_kernel, act_dtype=act_dtype)

    out = pl.pallas_call(
        kernel,
        out_shape=jax.ShapeDtypeStruct((num_tiles, 1, TM), jnp.float32),
        grid=(num_tiles,),
        in_specs=[
            pl.BlockSpec((TM, D), lambda i: (i, 0)),            # x tile (pipelined, f32)
            pl.BlockSpec((D, H1), lambda i: (0, 0)),            # w1, VMEM-resident
            pl.BlockSpec((1, H1), lambda i: (0, 0)),            # b1
            pl.BlockSpec((H1, H2), lambda i: (0, 0)),           # w2
            pl.BlockSpec((1, H2), lambda i: (0, 0)),            # b2
            pl.BlockSpec((1, H2), lambda i: (0, 0)),            # w3 row
            pl.BlockSpec(memory_space=pltpu.MemorySpace.SMEM),  # b3 scalar
        ],
        out_specs=pl.BlockSpec((1, 1, TM), lambda i: (i, 0, 0)),  # lane-dense output row
        compiler_params=pltpu.CompilerParams(
            dimension_semantics=("parallel",),                  # megacore on v7x
        ),
    )(xp, w1, b1, w2, b2, w3r, b3)

    # out[i, 0, t] = prediction for row i*TM + t.
    return out.reshape(-1)[:B].reshape(B, 1)


def init_params(key, input_size, layer_sizes=(256, 128)):
    """Deterministic init mimicking PyTorch Linear default U(-1/sqrt(fan_in), 1/sqrt(fan_in))."""
    dims = [input_size] + list(layer_sizes) + [1]
    params = {}
    for i in range(len(dims) - 1):
        key, kw, kb = jax.random.split(key, 3)
        fan_in = dims[i]
        bound = 1.0 / jnp.sqrt(fan_in)
        params[f"w{i+1}"] = jax.random.uniform(
            kw, (dims[i], dims[i + 1]), jnp.float32, -bound, bound)
        params[f"b{i+1}"] = jax.random.uniform(
            kb, (1, dims[i + 1]), jnp.float32, -bound, bound)
    return params


def reference_forward(x, params):
    """Pure-JAX reference with the same bf16-input / f32-accumulate matmul precision."""
    h = jnp.dot(x.astype(jnp.bfloat16), params["w1"].astype(jnp.bfloat16),
                preferred_element_type=jnp.float32) + params["b1"]
    h = jnp.where(h > 0, h, 0.1 * h)
    h = jnp.dot(h.astype(jnp.bfloat16), params["w2"].astype(jnp.bfloat16),
                preferred_element_type=jnp.float32) + params["b2"]
    h = jnp.where(h > 0, h, 0.1 * h)
    h = jnp.dot(h.astype(jnp.bfloat16), params["w3"].astype(jnp.bfloat16),
                preferred_element_type=jnp.float32) + params["b3"]
    return jax.nn.sigmoid(h)


if __name__ == "__main__":
    key = jax.random.PRNGKey(0)
    k_x, k_p, k_x2 = jax.random.split(key, 3)

    batch, input_size = 8, 32
    x = jax.random.normal(k_x, (batch, input_size), jnp.float32)
    params = init_params(k_p, input_size, layer_sizes=(256, 128))

    # Small-shape run (single tiny tile).
    out = jax.block_until_ready(sensitive_discriminator(x, params))
    ref = reference_forward(x, params)
    assert out.shape == (batch, 1)
    assert jnp.allclose(out, ref, atol=5e-3, rtol=5e-3), (out, ref)

    # Multi-tile run exercising the batch grid (even tile count) + remainder padding path.
    batch2 = 600
    x2 = jax.random.normal(k_x2, (batch2, input_size), jnp.float32)
    out2 = jax.block_until_ready(
        sensitive_discriminator(x2, params, block_rows=256))
    ref2 = reference_forward(x2, params)
    assert out2.shape == (batch2, 1)
    assert jnp.allclose(out2, ref2, atol=5e-3, rtol=5e-3), (out2, ref2)

    print("KERNEL_OK")
</pallas_src>

<mosaic_0001>
module attributes {stable_mosaic.version = 11 : i64} {
  func.func @mlp_kernel(%arg0: i32, %arg1: memref<16x32xf32, #tpu.memory_space<vmem>>, %arg2: memref<32x256xbf16, #tpu.memory_space<vmem>>, %arg3: memref<1x256xbf16, #tpu.memory_space<vmem>>, %arg4: memref<256x128xbf16, #tpu.memory_space<vmem>>, %arg5: memref<1x128xbf16, #tpu.memory_space<vmem>>, %arg6: memref<1x128xbf16, #tpu.memory_space<vmem>>, %arg7: memref<1xf32, #tpu.memory_space<smem>>, %arg8: memref<1x1x16xf32, #tpu.memory_space<vmem>>) attributes {dimension_semantics = [#tpu.dimension_semantics<parallel>], iteration_bounds = array<i64: 1>, scalar_prefetch = 0 : i64, scratch_operands = 0 : i64, tpu.core_type = #tpu.core_type<tc>, window_params = [{transform_indices = @transform_0, window_bounds = array<i64: 16, 32>}, {pipeline_mode = #tpu.pipeline_mode<synchronous>, transform_indices = @transform_1, window_bounds = array<i64: 32, 256>}, {pipeline_mode = #tpu.pipeline_mode<synchronous>, transform_indices = @transform_2, window_bounds = array<i64: 1, 256>}, {pipeline_mode = #tpu.pipeline_mode<synchronous>, transform_indices = @transform_3, window_bounds = array<i64: 256, 128>}, {pipeline_mode = #tpu.pipeline_mode<synchronous>, transform_indices = @transform_4, window_bounds = array<i64: 1, 128>}, {pipeline_mode = #tpu.pipeline_mode<synchronous>, transform_indices = @transform_5, window_bounds = array<i64: 1, 128>}, {transform_indices = @transform_6, window_bounds = array<i64: 1>}, {transform_indices = @transform_7, window_bounds = array<i64: 1, 1, 16>}]} {
    %c0 = arith.constant 0 : index
    %c0_0 = arith.constant 0 : index
    %0 = vector.load %arg1[%c0, %c0_0] : memref<16x32xf32, #tpu.memory_space<vmem>>, vector<16x32xf32>
    %1 = arith.truncf %0 : vector<16x32xf32> to vector<16x32xbf16>
    %c0_1 = arith.constant 0 : index
    %c0_2 = arith.constant 0 : index
    %2 = vector.load %arg2[%c0_1, %c0_2] : memref<32x256xbf16, #tpu.memory_space<vmem>>, vector<32x256xbf16>
    %cst = arith.constant dense<0.000000e+00> : vector<16x256xf32>
    %3 = tpu.matmul %1, %2, %cst {dimension_numbers = #tpu.dot_dimension_numbers<[1], [0], [0], [1], [0, 0, 1, 1], [], []>} : vector<16x32xbf16>, vector<32x256xbf16>, vector<16x256xf32> -> vector<16x256xf32>
    %4 = arith.truncf %3 : vector<16x256xf32> to vector<16x256xbf16>
    %c0_3 = arith.constant 0 : index
    %c0_4 = arith.constant 0 : index
    %5 = vector.load %arg3[%c0_3, %c0_4] : memref<1x256xbf16, #tpu.memory_space<vmem>>, vector<1x256xbf16>
    %6 = vector.broadcast %5 : vector<1x256xbf16> to vector<16x256xbf16>
    %7 = arith.addf %4, %6 : vector<16x256xbf16>
    %cst_5 = arith.constant 1.000980e-01 : bf16
    %8 = vector.broadcast %cst_5 : bf16 to vector<16x256xbf16>
    %9 = arith.mulf %8, %7 : vector<16x256xbf16>
    %10 = arith.maximumf %7, %9 : vector<16x256xbf16>
    %c0_6 = arith.constant 0 : index
    %c0_7 = arith.constant 0 : index
    %11 = vector.load %arg4[%c0_6, %c0_7] : memref<256x128xbf16, #tpu.memory_space<vmem>>, vector<256x128xbf16>
    %cst_8 = arith.constant dense<0.000000e+00> : vector<16x128xf32>
    %12 = tpu.matmul %10, %11, %cst_8 {dimension_numbers = #tpu.dot_dimension_numbers<[1], [0], [0], [1], [0, 0, 1, 1], [], []>} : vector<16x256xbf16>, vector<256x128xbf16>, vector<16x128xf32> -> vector<16x128xf32>
    %13 = arith.truncf %12 : vector<16x128xf32> to vector<16x128xbf16>
    %c0_9 = arith.constant 0 : index
    %c0_10 = arith.constant 0 : index
    %14 = vector.load %arg5[%c0_9, %c0_10] : memref<1x128xbf16, #tpu.memory_space<vmem>>, vector<1x128xbf16>
    %15 = vector.broadcast %14 : vector<1x128xbf16> to vector<16x128xbf16>
    %16 = arith.addf %13, %15 : vector<16x128xbf16>
    %cst_11 = arith.constant 1.000980e-01 : bf16
    %17 = vector.broadcast %cst_11 : bf16 to vector<16x128xbf16>
    %18 = arith.mulf %17, %16 : vector<16x128xbf16>
    %19 = arith.maximumf %16, %18 : vector<16x128xbf16>
    %c0_12 = arith.constant 0 : index
    %c0_13 = arith.constant 0 : index
    %20 = vector.load %arg6[%c0_12, %c0_13] : memref<1x128xbf16, #tpu.memory_space<vmem>>, vector<1x128xbf16>
    %cst_14 = arith.constant dense<0.000000e+00> : vector<1x16xf32>
    %21 = tpu.matmul %20, %19, %cst_14 {dimension_numbers = #tpu.dot_dimension_numbers<[1], [1], [0], [0], [0, 0, 1, 0], [], []>} : vector<1x128xbf16>, vector<16x128xbf16>, vector<1x16xf32> -> vector<1x16xf32>
    %c0_15 = arith.constant 0 : index
    %22 = memref.load %arg7[%c0_15] : memref<1xf32, #tpu.memory_space<smem>>
    %23 = vector.broadcast %22 : f32 to vector<1x16xf32>
    %24 = arith.addf %21, %23 : vector<1x16xf32>
    %cst_16 = arith.constant 5.000000e-01 : f32
    %25 = vector.broadcast %cst_16 : f32 to vector<1x16xf32>
    %26 = arith.mulf %25, %24 : vector<1x16xf32>
    %27 = math.tanh %26 : vector<1x16xf32>
    %cst_17 = arith.constant 5.000000e-01 : f32
    %28 = vector.broadcast %cst_17 : f32 to vector<1x16xf32>
    %29 = arith.mulf %28, %27 : vector<1x16xf32>
    %cst_18 = arith.constant 5.000000e-01 : f32
    %30 = vector.broadcast %cst_18 : f32 to vector<1x16xf32>
    %31 = arith.addf %29, %30 : vector<1x16xf32>
    %c0_19 = arith.constant 0 : index
    %c0_20 = arith.constant 0 : index
    %c0_21 = arith.constant 0 : index
    %32 = vector.load %arg8[%c0_19, %c0_20, %c0_21] : memref<1x1x16xf32, #tpu.memory_space<vmem>>, vector<1x1x16xf32>
    %33 = vector.shape_cast %32 : vector<1x1x16xf32> to vector<1x16xf32>
    %34 = vector.shape_cast %31 : vector<1x16xf32> to vector<1x1x16xf32>
    tpu.vector_store %arg8[%c0_19, %c0_20, %c0_21], %34 {strides = array<i32>} : memref<1x1x16xf32, #tpu.memory_space<vmem>>, vector<1x1x16xf32>,
    return
  }
  func.func @transform_0(%arg0: i32) -> (i32, i32) {
    %c0_i32 = arith.constant 0 : i32
    %c0_i32_0 = arith.constant 0 : i32
    return %arg0, %c0_i32 : i32, i32
  }
  func.func @transform_1(%arg0: i32) -> (i32, i32) {
    %c0_i32 = arith.constant 0 : i32
    %c0_i32_0 = arith.constant 0 : i32
    %c0_i32_1 = arith.constant 0 : i32
    return %c0_i32, %c0_i32_0 : i32, i32
  }
  func.func @transform_2(%arg0: i32) -> (i32, i32) {
    %c0_i32 = arith.constant 0 : i32
    %c0_i32_0 = arith.constant 0 : i32
    %c0_i32_1 = arith.constant 0 : i32
    return %c0_i32, %c0_i32_0 : i32, i32
  }
  func.func @transform_3(%arg0: i32) -> (i32, i32) {
    %c0_i32 = arith.constant 0 : i32
    %c0_i32_0 = arith.constant 0 : i32
    %c0_i32_1 = arith.constant 0 : i32
    return %c0_i32, %c0_i32_0 : i32, i32
  }
  func.func @transform_4(%arg0: i32) -> (i32, i32) {
    %c0_i32 = arith.constant 0 : i32
    %c0_i32_0 = arith.constant 0 : i32
    %c0_i32_1 = arith.constant 0 : i32
    return %c0_i32, %c0_i32_0 : i32, i32
  }
  func.func @transform_5(%arg0: i32) -> (i32, i32) {
    %c0_i32 = arith.constant 0 : i32
    %c0_i32_0 = arith.constant 0 : i32
    %c0_i32_1 = arith.constant 0 : i32
    return %c0_i32, %c0_i32_0 : i32, i32
  }
  func.func @transform_6(%arg0: i32) -> i32 {
    %c0_i32 = arith.constant 0 : i32
    %c0_i32_0 = arith.constant 0 : i32
    return %c0_i32 : i32
  }
  func.func @transform_7(%arg0: i32) -> (i32, i32, i32) {
    %c0_i32 = arith.constant 0 : i32
    %c0_i32_0 = arith.constant 0 : i32
    %c0_i32_1 = arith.constant 0 : i32
    return %arg0, %c0_i32, %c0_i32_0 : i32, i32, i32
  }
}

</mosaic_0001>

<llo_original>
// kernel: tpu_custom_call.1
$region0: #{tpu_custom_call.1}
  #allocation0 [shape = 'u32[]', space=smem, size = 0x4, offset = 0x4, fixed_abs, tag = 'smem constant byte address 0x4 - core index']
  #allocation1 [shape = 'u32[72,128]{1,0:T(1,128)}', space=vmem, size = 0x9000, scoped, tag = 'internal scratch']
  #allocation2 [shape = 'f32[1]{0:T(128)S(6)}', space=smem, size = 0x200, scoped, tag = 'scoped memory for tpu_custom_call.1']
  %s0 = inlined_call_operand.hbm [shape: f32[16,32], index: 0, kind: input, shape index: {}]
  %s1 = inlined_call_operand.hbm [shape: bf16[32,256], index: 1, kind: input, shape index: {}]
  %s2 = inlined_call_operand.vmem [shape: bf16[1,256], index: 2, kind: input, shape index: {}]
  %s3 = inlined_call_operand.hbm [shape: bf16[256,128], index: 3, kind: input, shape index: {}]
  %s4 = inlined_call_operand.vmem [shape: bf16[1,128], index: 4, kind: input, shape index: {}]
  %s5 = inlined_call_operand.vmem [shape: bf16[1,128], index: 5, kind: input, shape index: {}]
  %s6 = inlined_call_operand.<no memory space> [shape: f32[1], index: 6, kind: input, shape index: {}]
  %s7 = inlined_call_operand.hbm [shape: f32[1,1,16], index: 7, kind: output, shape index: {}]
  %s8 = sld [smem:[#allocation0]]
  $region50: #{tpu_custom_call.1} parent=0
    _
  %s10 = ssub.s32 1, %s8
  %s11 = scalar_select 0, %s10, %s8
  %12 = sst [smem:[#allocation2]] %s6
  $region1: #{tpu_custom_call.1} parent=0
    #allocation3 [shape = 'u8[8192]{0}', space=vmem, size = 0x2000, scoped, tag = 'input window, operand 0, single buffered']
    #allocation4 [shape = 's32[1]{0}', space=sflag, size = 0x4, scoped, tag = 'scoped memory for tpu_custom_call.1']
    #allocation5 [shape = 's32[1]{0}', space=sflag, size = 0x4, scoped, tag = 'scoped memory for tpu_custom_call.1']
    #allocation6 [shape = 'u8[16384]{0}', space=vmem, size = 0x4000, scoped, tag = 'input window, operand 1, single buffered']
    #allocation7 [shape = 's32[1]{0}', space=sflag, size = 0x4, scoped, tag = 'scoped memory for tpu_custom_call.1']
    #allocation8 [shape = 'u8[65536]{0}', space=vmem, size = 0x10000, scoped, tag = 'input window, operand 3, single buffered']
    #allocation9 [shape = 'u8[512]{0}', space=vmem, size = 0x400, scoped, tag = 'output window, operand 0, single buffered']
    %13 = vsyncpa [#allocation4], 0
    %14 = vsyncpa [#allocation7], 0
    %15 = vsyncpa [#allocation5], 0
    // Predicated region
    $region2: #{tpu_custom_call.1} parent=1 // pred_check
      _
    $region3: #{tpu_custom_call.1} parent=1 // pred_check_branch
      %17 = sbr.rel (0) target = $region5
    $region4: #{tpu_custom_call.1} parent=1 // pred_region
      %19 = vsyncadd [#allocation4], 0
      %s20 = sshll.u32 %s0, 4
      %s21 = int_to_ptr.hbm [resolvable:$true] %s20
      %s22 = sshll.u32 [#allocation3], 4
      %s23 = int_to_ptr.vmem [resolvable:$true] %s22
      %28 = dma.hbm_to_vmem [thread:$0]  %s21, 256, %s23, [#allocation4], 128, 128, 8
    $region5: #{tpu_custom_call.1} parent=1 // pred_fallthru
      _
    // Predicated region
    $region6: #{tpu_custom_call.1} parent=1 // pred_check
      _
    $region7: #{tpu_custom_call.1} parent=1 // pred_check_branch
      %30 = sbr.rel (0) target = $region9
    $region8: #{tpu_custom_call.1} parent=1 // pred_region
      %32 = vsyncadd [#allocation7], 0
      %s33 = sshll.u32 %s1, 4
      %s34 = int_to_ptr.hbm [resolvable:$true] %s33
      %s35 = sshll.u32 [#allocation6], 4
      %s36 = int_to_ptr.vmem [resolvable:$true] %s35
      %41 = dma.hbm_to_vmem [thread:$0]  %s34, 512, %s36, [#allocation7], 128, 128, 8
    $region9: #{tpu_custom_call.1} parent=1 // pred_fallthru
      _
    // Predicated region
    $region10: #{tpu_custom_call.1} parent=1 // pred_check
      _
    $region11: #{tpu_custom_call.1} parent=1 // pred_check_branch
      %43 = sbr.rel (0) target = $region13
    $region12: #{tpu_custom_call.1} parent=1 // pred_region
      _
    $region13: #{tpu_custom_call.1} parent=1 // pred_fallthru
      _
    // Predicated region
    $region14: #{tpu_custom_call.1} parent=1 // pred_check
      _
    $region15: #{tpu_custom_call.1} parent=1 // pred_check_branch
      %45 = sbr.rel (0) target = $region17
    $region16: #{tpu_custom_call.1} parent=1 // pred_region
      %47 = vsyncadd [#allocation7], 0
      %s48 = sshll.u32 %s3, 4
      %s49 = int_to_ptr.hbm [resolvable:$true] %s48
      %s50 = sshll.u32 [#allocation8], 4
      %s51 = int_to_ptr.vmem [resolvable:$true] %s50
      %56 = dma.hbm_to_vmem [thread:$0]  %s49, 2048, %s51, [#allocation7], 64, 64, 4
    $region17: #{tpu_custom_call.1} parent=1 // pred_fallthru
      _
    // Predicated region
    $region18: #{tpu_custom_call.1} parent=1 // pred_check
      _
    $region19: #{tpu_custom_call.1} parent=1 // pred_check_branch
      %58 = sbr.rel (0) target = $region21
    $region20: #{tpu_custom_call.1} parent=1 // pred_region
      _
    $region21: #{tpu_custom_call.1} parent=1 // pred_fallthru
      _
    // Predicated region
    $region22: #{tpu_custom_call.1} parent=1 // pred_check
      _
    $region23: #{tpu_custom_call.1} parent=1 // pred_check_branch
      %60 = sbr.rel (0) target = $region25
    $region24: #{tpu_custom_call.1} parent=1 // pred_region
      _
    $region25: #{tpu_custom_call.1} parent=1 // pred_fallthru
      _
    // Predicated region
    $region26: #{tpu_custom_call.1} parent=1 // pred_check
      _
    $region27: #{tpu_custom_call.1} parent=1 // pred_check_branch
      %62 = sbr.rel (0) target = $region29
    $region28: #{tpu_custom_call.1} parent=1 // pred_region
      _
    $region29: #{tpu_custom_call.1} parent=1 // pred_fallthru
      _
    // Predicated region
    $region30: #{tpu_custom_call.1} parent=1 // pred_check
      _
    $region31: #{tpu_custom_call.1} parent=1 // pred_check_branch
      %64 = sbr.rel (0) target = $region33
    $region32: #{tpu_custom_call.1} parent=1 // pred_region
      %66 = dma.done [#allocation4], 256
    $region33: #{tpu_custom_call.1} parent=1 // pred_fallthru
      _
    // Predicated region
    $region34: #{tpu_custom_call.1} parent=1 // pred_check
      _
    $region35: #{tpu_custom_call.1} parent=1 // pred_check_branch
      %68 = sbr.rel (0) target = $region37
    $region36: #{tpu_custom_call.1} parent=1 // pred_region
      %70 = dma.done [#allocation7], 512
    $region37: #{tpu_custom_call.1} parent=1 // pred_fallthru
      _
    // Predicated region
    $region38: #{tpu_custom_call.1} parent=1 // pred_check
      _
    $region39: #{tpu_custom_call.1} parent=1 // pred_check_branch
      %72 = sbr.rel (0) target = $region41
    $region40: #{tpu_custom_call.1} parent=1 // pred_region
      %74 = dma.done [#allocation7], 2048
    $region41: #{tpu_custom_call.1} parent=1 // pred_fallthru
      _
    %v76 = vld [vmem:[#allocation3] sm:$0xff]
    %v77 = vld [vmem:[#allocation3 + $0x8] sm:$0xff]
    %v78 = vpack.c.bf16 %v77, %v76
    %v79 = vld [vmem:[#allocation6] sm:$0xff]
    %v80 = vld [vmem:[#allocation6 + $0x8] sm:$0xff]
    %v81 = vld [vmem:[#allocation6 + $0x10] sm:$0xff]
    %v82 = vld [vmem:[#allocation6 + $0x18] sm:$0xff]
    %v87 = vunpack.c.l.b16 %v79
    %v88 = vunpack.c.h.b16 %v79
    %v89 = vunpack.c.l.b16 %v80
    %v90 = vunpack.c.h.b16 %v80
    %v91 = vunpack.c.l.b16 %v81
    %v92 = vunpack.c.h.b16 %v81
    %v93 = vunpack.c.l.b16 %v82
    %v94 = vunpack.c.h.b16 %v82
    %v95 = vpack.c.b16 %v89, %v87
    %v96 = vpack.c.b16 %v90, %v88
    %v97 = vpack.c.b16 %v93, %v91
    %v98 = vpack.c.b16 %v94, %v92
    %vm103 = vcmask 261120
    %v105 = vsel %vm103, %v78, 0
    %107 = vmatpush.bf16.msra.mxu0 0
    %108 = vmatpush.bf16.msra.mxu0 0
    %109 = vmatpush.bf16.msra.mxu0 0
    %110 = vmatpush.bf16.msra.mxu0 0
    %111 = vmatpush.bf16.msra.mxu0 0
    %112 = vmatpush.bf16.msra.mxu0 0
    %113 = vmatpush.bf16.msra.mxu0 %v97
    %114 = vmatpush.bf16.msra.mxu0 %v95
    %115 = vmatmul.bf16.gmra.mxu0 %v105
    %v116 = vpop.f32.mrf.mxu0
    %v117 = vadd.f32 0.0, %v116
    %v118 = vpop.f32.mrf.mxu0
    %v119 = vadd.f32 0.0, %v118
    %120 = vdwg.mxu0
    %121 = vmatpush.bf16.msra.mxu0 0
    %122 = vmatpush.bf16.msra.mxu0 0
    %123 = vmatpush.bf16.msra.mxu0 0
    %124 = vmatpush.bf16.msra.mxu0 0
    %125 = vmatpush.bf16.msra.mxu0 0
    %126 = vmatpush.bf16.msra.mxu0 0
    %127 = vmatpush.bf16.msra.mxu0 %v98
    %128 = vmatpush.bf16.msra.mxu0 %v96
    %129 = vmatmul.bf16.gmra.mxu0 %v105
    %v130 = vpop.f32.mrf.mxu0
    %v131 = vadd.f32 0.0, %v130
    %v132 = vpop.f32.mrf.mxu0
    %v133 = vadd.f32 0.0, %v132
    %134 = vdwg.mxu0
    %v135 = vpack.c.bf16 %v131, %v117
    %v136 = vpack.c.bf16 %v133, %v119
    %v137 = vld [vmem:[%s2] sm:$0x3]
    %139 = vst [vmem:[#allocation1] ss:$9 sm:$0xff] %v137
    %v140 = vld [vmem:[#allocation1] sm:$0xff]
    %v141 = vld [vmem:[#allocation1 + $0x9] sm:$0xff]
    %v142 = vpack.i.b16 %v140, %v140
    %v144 = vperm.slane %v142, 0
    %v145 = vpack.i.b16 %v141, %v141
    %v147 = vperm.slane %v145, 0
    %v148 = vunpack.c.l.bf16 %v135
    %v149 = vunpack.c.h.bf16 %v135
    %v150 = vunpack.c.l.bf16 %v136
    %v151 = vunpack.c.h.bf16 %v136
    %v152 = vunpack.c.l.bf16 %v144
    %v153 = vunpack.c.l.bf16 %v147
    %v154 = vadd.f32 %v148, %v152
    %v155 = vadd.f32 %v149, %v153
    %v156 = vadd.f32 %v150, %v152
    %v157 = vadd.f32 %v151, %v153
    %v158 = vpack.c.bf16 %v155, %v154
    %v159 = vpack.c.bf16 %v157, %v156
    %v160 = vunpack.c.l.bf16 %v158
    %v161 = vunpack.c.h.bf16 %v158
    %v162 = vunpack.c.l.bf16 %v159
    %v163 = vunpack.c.h.bf16 %v159
    %v164 = vmul.f32 %v160, 0.100097656
    %v165 = vmul.f32 %v161, 0.100097656
    %v166 = vmul.f32 %v162, 0.100097656
    %v167 = vmul.f32 %v163, 0.100097656
    %v168 = vpack.c.bf16 %v165, %v164
    %v169 = vpack.c.bf16 %v167, %v166
    %v170 = vunpack.c.l.bf16 %v168
    %v171 = vunpack.c.h.bf16 %v168
    %v172 = vunpack.c.l.bf16 %v169
    %v173 = vunpack.c.h.bf16 %v169
    %v174 = vmax.f32 %v160, %v170
    %v175 = vmax.f32 %v161, %v171
    %v176 = vmax.f32 %v162, %v172
    %v177 = vmax.f32 %v163, %v173
    %v178 = vpack.c.bf16 %v176, %v174
    %v179 = vpack.c.bf16 %v177, %v175
    %v180 = vld [vmem:[#allocation8] sm:$0xf]
    %v181 = vld [vmem:[#allocation8 + $0x4] sm:$0xf]
    %v182 = vld [vmem:[#allocation8 + $0x8] sm:$0xf]
    %v183 = vld [vmem:[#allocation8 + $0xc] sm:$0xf]
    %v184 = vld [vmem:[#allocation8 + $0x10] sm:$0xf]
    %v185 = vld [vmem:[#allocation8 + $0x14] sm:$0xf]
    %v186 = vld [vmem:[#allocation8 + $0x18] sm:$0xf]
    %v187 = vld [vmem:[#allocation8 + $0x1c] sm:$0xf]
    %v188 = vld [vmem:[#allocation8 + $0x20] sm:$0xf]
    %v189 = vld [vmem:[#allocation8 + $0x24] sm:$0xf]
    %v190 = vld [vmem:[#allocation8 + $0x28] sm:$0xf]
    %v191 = vld [vmem:[#allocation8 + $0x2c] sm:$0xf]
    %v192 = vld [vmem:[#allocation8 + $0x30] sm:$0xf]
    %v193 = vld [vmem:[#allocation8 + $0x34] sm:$0xf]
    %v194 = vld [vmem:[#allocation8 + $0x38] sm:$0xf]
    %v195 = vld [vmem:[#allocation8 + $0x3c] sm:$0xf]
    %v196 = vld [vmem:[#allocation8 + $0x40] sm:$0xf]
    %v197 = vld [vmem:[#allocation8 + $0x44] sm:$0xf]
    %v198 = vld [vmem:[#allocation8 + $0x48] sm:$0xf]
    %v199 = vld [vmem:[#allocation8 + $0x4c] sm:$0xf]
    %v200 = vld [vmem:[#allocation8 + $0x50] sm:$0xf]
    %v201 = vld [vmem:[#allocation8 + $0x54] sm:$0xf]
    %v202 = vld [vmem:[#allocation8 + $0x58] sm:$0xf]
    %v203 = vld [vmem:[#allocation8 + $0x5c] sm:$0xf]
    %v204 = vld [vmem:[#allocation8 + $0x60] sm:$0xf]
    %v205 = vld [vmem:[#allocation8 + $0x64] sm:$0xf]
    %v206 = vld [vmem:[#allocation8 + $0x68] sm:$0xf]
    %v207 = vld [vmem:[#allocation8 + $0x6c] sm:$0xf]
    %v208 = vld [vmem:[#allocation8 + $0x70] sm:$0xf]
    %v209 = vld [vmem:[#allocation8 + $0x74] sm:$0xf]
    %v210 = vld [vmem:[#allocation8 + $0x78] sm:$0xf]
    %v211 = vld [vmem:[#allocation8 + $0x7c] sm:$0xf]
    %v244 = vunpack.c.l.b16 %v180
    %v245 = vunpack.c.l.b16 %v181
    %v246 = vunpack.c.l.b16 %v182
    %v247 = vunpack.c.l.b16 %v183
    %v248 = vunpack.c.l.b16 %v184
    %v249 = vunpack.c.l.b16 %v185
    %v250 = vunpack.c.l.b16 %v186
    %v251 = vunpack.c.l.b16 %v187
    %v252 = vunpack.c.l.b16 %v188
    %v253 = vunpack.c.l.b16 %v189
    %v254 = vunpack.c.l.b16 %v190
    %v255 = vunpack.c.l.b16 %v191
    %v256 = vunpack.c.l.b16 %v192
    %v257 = vunpack.c.l.b16 %v193
    %v258 = vunpack.c.l.b16 %v194
    %v259 = vunpack.c.l.b16 %v195
    %v260 = vunpack.c.l.b16 %v196
    %v261 = vunpack.c.l.b16 %v197
    %v262 = vunpack.c.l.b16 %v198
    %v263 = vunpack.c.l.b16 %v199
    %v264 = vunpack.c.l.b16 %v200
    %v265 = vunpack.c.l.b16 %v201
    %v266 = vunpack.c.l.b16 %v202
    %v267 = vunpack.c.l.b16 %v203
    %v268 = vunpack.c.l.b16 %v204
    %v269 = vunpack.c.l.b16 %v205
    %v270 = vunpack.c.l.b16 %v206
    %v271 = vunpack.c.l.b16 %v207
    %v272 = vunpack.c.l.b16 %v208
    %v273 = vunpack.c.l.b16 %v209
    %v274 = vunpack.c.l.b16 %v210
    %v275 = vunpack.c.l.b16 %v211
    %v276 = vpack.c.b16 %v245, %v244
    %v277 = vpack.c.b16 %v247, %v246
    %v278 = vpack.c.b16 %v249, %v248
    %v279 = vpack.c.b16 %v251, %v250
    %v280 = vpack.c.b16 %v253, %v252
    %v281 = vpack.c.b16 %v255, %v254
    %v282 = vpack.c.b16 %v257, %v256
    %v283 = vpack.c.b16 %v259, %v258
    %v284 = vpack.c.b16 %v261, %v260
    %v285 = vpack.c.b16 %v263, %v262
    %v286 = vpack.c.b16 %v265, %v264
    %v287 = vpack.c.b16 %v267, %v266
    %v288 = vpack.c.b16 %v269, %v268
    %v289 = vpack.c.b16 %v271, %v270
    %v290 = vpack.c.b16 %v273, %v272
    %v291 = vpack.c.b16 %v275, %v274
    %308 = vmatpush.bf16.msra.mxu0 %v283
    %309 = vmatpush.bf16.msra.mxu0 %v282
    %310 = vmatpush.bf16.msra.mxu0 %v281
    %311 = vmatpush.bf16.msra.mxu0 %v280
    %312 = vmatpush.bf16.msra.mxu0 %v279
    %313 = vmatpush.bf16.msra.mxu0 %v278
    %314 = vmatpush.bf16.msra.mxu0 %v277
    %315 = vmatpush.bf16.msra.mxu0 %v276
    %316 = vmatmul.bf16.gmra.mxu0 %v178
    %v317 = vpop.f32.mrf.mxu0
    %v318 = vadd.f32 0.0, %v317
    %v319 = vpop.f32.mrf.mxu0
    %v320 = vadd.f32 0.0, %v319
    %321 = vdwg.mxu0
    %322 = vmatpush.bf16.msra.mxu0 %v291
    %323 = vmatpush.bf16.msra.mxu0 %v290
    %324 = vmatpush.bf16.msra.mxu0 %v289
    %325 = vmatpush.bf16.msra.mxu0 %v288
    %326 = vmatpush.bf16.msra.mxu0 %v287
    %327 = vmatpush.bf16.msra.mxu0 %v286
    %328 = vmatpush.bf16.msra.mxu0 %v285
    %329 = vmatpush.bf16.msra.mxu0 %v284
    %330 = vmatmul.bf16.gmra.mxu0 %v179
    %v331 = vpop.f32.mrf.mxu0
    %v332 = vadd.f32 %v318, %v331
    %v333 = vpop.f32.mrf.mxu0
    %v334 = vadd.f32 %v320, %v333
    %335 = vdwg.mxu0
    %v336 = vpack.c.bf16 %v332, %v332
    %v337 = vpack.c.bf16 %v334, %v334
    %v338 = vld [vmem:[%s4] sm:$0x1]
    %v340 = vpack.i.b16 %v338, %v338
    %v342 = vperm.slane %v340, 0
    %v343 = vunpack.c.l.bf16 %v336
    %v344 = vunpack.c.l.bf16 %v337
    %v345 = vunpack.c.l.bf16 %v342
    %v346 = vadd.f32 %v343, %v345
    %v347 = vadd.f32 %v344, %v345
    %v348 = vpack.c.bf16 %v346, %v346
    %v349 = vpack.c.bf16 %v347, %v347
    %v350 = vunpack.c.l.bf16 %v348
    %v351 = vunpack.c.l.bf16 %v349
    %v352 = vmul.f32 %v350, 0.100097656
    %v353 = vmul.f32 %v351, 0.100097656
    %v354 = vpack.c.bf16 %v352, %v352
    %v355 = vpack.c.bf16 %v353, %v353
    %v356 = vunpack.c.l.bf16 %v354
    %v357 = vunpack.c.l.bf16 %v355
    %v358 = vmax.f32 %v350, %v356
    %v359 = vmax.f32 %v351, %v357
    %v360 = vpack.c.bf16 %v359, %v358
    %v361 = vld [vmem:[%s5] sm:$0x1]
    %s362 = sld [smem:[#allocation2]]
    %v363 = vstv %s362
    %364 = vmatpush.bf16.xpose.msra.mxu0 0
    %365 = vmatpush.bf16.xpose.msra.mxu0 0
    %366 = vmatpush.bf16.xpose.msra.mxu0 0
    %367 = vmatpush.bf16.xpose.msra.mxu0 0
    %368 = vmatpush.bf16.xpose.msra.mxu0 0
    %369 = vmatpush.bf16.xpose.msra.mxu0 0
    %370 = vmatpush.bf16.xpose.msra.mxu0 0
    %371 = vmatpush.bf16.xpose.msra.mxu0 %v360
    %372 = vmatmul.bf16.gmra.mxu0 %v361
    %v373 = vpop.f32.mrf.mxu0
    %v374 = vadd.f32 %v363, %v373
    %v375 = vpop.f32.mrf.mxu0
    %376 = vdwg.mxu0
    %v377 = vmul.f32 %v374, 0.5
    %v378 = vtanh.pop %v377
    %v379 = vmul.f32 %v378, 0.5
    %v380 = vadd.f32 %v379, 0.5
    %vm381 = vcmask 122880
    %382 = vst.msk [vmem:[#allocation9] sm:$0x1] %vm381, %v380
    // Predicated region
    $region42: #{tpu_custom_call.1} parent=1 // pred_check
      _
    $region43: #{tpu_custom_call.1} parent=1 // pred_check_branch
      %384 = sbr.rel (0) target = $region45
    $region44: #{tpu_custom_call.1} parent=1 // pred_region
      %386 = vsyncadd [#allocation5], 0
      %s388 = sshll.u32 [#allocation9], 4
      %s389 = int_to_ptr.vmem [resolvable:$true] %s388
      %s390 = sshll.u32 %s7, 4
      %s391 = int_to_ptr.hbm [resolvable:$true] %s390
      %393 = dma.vmem_to_hbm [thread:$0]  %s389, 16, %s391, [#allocation5]
    $region45: #{tpu_custom_call.1} parent=1 // pred_fallthru
      _
    // Predicated region
    $region46: #{tpu_custom_call.1} parent=1 // pred_check
      _
    $region47: #{tpu_custom_call.1} parent=1 // pred_check_branch
      %395 = sbr.rel (0) target = $region49
    $region48: #{tpu_custom_call.1} parent=1 // pred_region
      %397 = dma.done [#allocation5], 16
    $region49: #{tpu_custom_call.1} parent=1 // pred_fallthru
      _
    %398 = vsyncpa [#allocation4], 1
    %399 = vsyncpa [#allocation7], 1
    %400 = vsyncpa [#allocation5], 1

</llo_original>
